<compile_context>
chip_gen: v7x
topology: tpu7x:2x2x1
jax: 0.10.0
libtpu: 0.0.40
codegen_flags: <defaults>
</compile_context>

<pallas_src>
import jax
import jax.numpy as jnp
from jax import lax
from jax.experimental import pallas as pl
from jax.experimental.pallas import tpu as pltpu


def make_ntxent_kernel(N, n_mem, tm, tn, temperature):
    """Builds the Pallas kernel body with static sizes baked in."""
    inv_temp = 1.0 / float(temperature)

    def kernel(x_col_ref, x_row_ref, o_ref, acc_mem_ref, acc_tot_ref):
        i = pl.program_id(0)           # row-tile index
        k = pl.program_id(1)           # column-tile (reduction) index

        @pl.when(k == 0)
        def _():
            acc_mem_ref[...] = jnp.zeros_like(acc_mem_ref)
            acc_tot_ref[...] = jnp.zeros_like(acc_tot_ref)

        xc = x_col_ref[...]            # (tm, 1) f32, mean-centered
        xr = x_row_ref[...]            # (1, tn) f32, mean-centered

        # exp(-|xc - xr| / 10) == min(exp(xc/10)*exp(-xr/10),
        #                             exp(-xc/10)*exp(xr/10))
        # -> only 2*(tm+tn) edge exps instead of tm*tn.  Inputs are centered
        # in the wrapper, so partial exps stay far from f32 overflow
        # (valid for |x - mean(x)| < ~880, true for any realistic losses).
        uc = jnp.exp(xc * 0.1)
        vc = jnp.exp(xc * -0.1)
        ur = jnp.exp(xr * 0.1)
        vr = jnp.exp(xr * -0.1)
        base = jnp.minimum(uc * vr, vc * ur)       # (tm, tn) = exp(-dist)

        e = jnp.exp(base * inv_temp)               # one EUP exp per element

        # Global row / column indices from cheap 1-D iotas (no (tm,tn) int32
        # temporaries).
        row_idx = i * tm + lax.broadcasted_iota(jnp.int32, (tm, 1), 0)
        col_idx = k * tn + lax.broadcasted_iota(jnp.int32, (1, tn), 1)

        # Zero the diagonal (== masked_fill(-inf) then exp in the reference)
        # and any padded columns, with a broadcast select.
        valid = (row_idx != col_idx) & (col_idx < N)
        e = jnp.where(valid, e, 0.0)

        # Column-group partial sums replace the (N,N) label matrix:
        #   num = same-group sum, den = total sum.
        e_mem = jnp.where(col_idx < n_mem, e, 0.0)
        acc_mem_ref[...] += jnp.sum(e_mem, axis=1, keepdims=True)
        acc_tot_ref[...] += jnp.sum(e, axis=1, keepdims=True)

        @pl.when(k == pl.num_programs(1) - 1)
        def _():
            s_mem = acc_mem_ref[...]
            s_tot = acc_tot_ref[...]
            row_is_mem = row_idx < n_mem           # (tm, 1)
            num = jnp.where(row_is_mem, s_mem, s_tot - s_mem)
            # -log(num / den) == log(den) - log(num)
            o_ref[...] = jnp.log(s_tot) - jnp.log(num)

    return kernel


def _round_up(x, m):
    return ((x + m - 1) // m) * m


def cus_ntxent_loss(mem_loss, non_loss, temperature=1.0):
    """JAX/Pallas equivalent of CusNTXentloss.forward."""
    # NOTE: for tiny N (<~128) plain XLA would beat the pallas_call overhead;
    # the Pallas path is kept unconditional here so the kernel is exercised.
    n_mem = int(mem_loss.shape[0])
    n_non = int(non_loss.shape[0])
    N = n_mem + n_non

    cat = jnp.concatenate([mem_loss, non_loss]).astype(jnp.float32)
    # Only pairwise differences matter; centering keeps the in-kernel 1-D exp
    # factorization far away from f32 overflow/underflow.
    cat = cat - jnp.mean(cat)

    # Pad the lane (column) axis to a multiple of 128 so every compare / exp /
    # reduce runs on full vregs; padded columns are masked inside the kernel,
    # padded rows are sliced off below.
    N_pad = _round_up(N, 128)
    TN = 512 if N_pad % 512 == 0 else (256 if N_pad % 256 == 0 else 128)
    TM = 256 if N_pad % 256 == 0 else 128

    cat_p = jnp.pad(cat, (0, N_pad - N))
    x_col = cat_p.reshape(N_pad, 1)
    x_row = cat_p.reshape(1, N_pad)

    kernel = make_ntxent_kernel(N=N, n_mem=n_mem, tm=TM, tn=TN,
                                temperature=float(temperature))

    grid = (N_pad // TM, N_pad // TN)
    out = pl.pallas_call(
        kernel,
        out_shape=jax.ShapeDtypeStruct((N_pad, 1), jnp.float32),
        grid_spec=pltpu.PrefetchScalarGridSpec(
            num_scalar_prefetch=0,
            grid=grid,
            in_specs=[
                pl.BlockSpec((TM, 1), lambda i, k: (i, 0)),   # row values
                pl.BlockSpec((1, TN), lambda i, k: (0, k)),   # column values
            ],
            out_specs=pl.BlockSpec((TM, 1), lambda i, k: (i, 0)),
            scratch_shapes=[
                pltpu.VMEM((TM, 1), jnp.float32),   # same-group partial sum
                pltpu.VMEM((TM, 1), jnp.float32),   # total partial sum
            ],
        ),
        compiler_params=pltpu.CompilerParams(
            dimension_semantics=("parallel", "arbitrary")),
    )(x_col, x_row)
    return out[:N, 0]


def cus_ntxent_loss_ref(mem_loss, non_loss, temperature=1.0):
    """Plain-JAX reference, mirrors the PyTorch module line by line."""
    n_mem = mem_loss.shape[0]
    n_non = non_loss.shape[0]
    N = n_mem + n_non
    cat = jnp.concatenate([mem_loss, non_loss]).astype(jnp.float32)
    mask = jnp.eye(N, dtype=bool)
    dist = jnp.abs(cat[None, :] - cat[:, None]) / 10.0
    sim = jnp.exp(-dist) / temperature
    sim = jnp.where(mask, -jnp.inf, sim)
    mem_label = jnp.concatenate([jnp.ones(n_mem), jnp.zeros(n_non)])
    non_label = jnp.concatenate([jnp.zeros(n_mem), jnp.ones(n_non)])
    label = jnp.concatenate(
        [jnp.tile(mem_label, (n_mem, 1)), jnp.tile(non_label, (n_non, 1))], axis=0
    )
    e = jnp.exp(sim)
    return -jnp.log(jnp.sum(e * label, axis=1) / jnp.sum(e, axis=1))


if __name__ == "__main__":
    key = jax.random.PRNGKey(0)
    k1, k2, k3, k4 = jax.random.split(key, 4)

    # Small case (matches the module's intended use): single grid point after
    # padding the 16 samples up to one 128-lane tile.
    mem_loss = jax.random.uniform(k1, (8,), jnp.float32, 0.0, 5.0)
    non_loss = jax.random.uniform(k2, (8,), jnp.float32, 0.0, 5.0)
    out = jax.block_until_ready(cus_ntxent_loss(mem_loss, non_loss, 1.0))
    ref = cus_ntxent_loss_ref(mem_loss, non_loss, 1.0)
    assert out.shape == (16,)
    assert jnp.allclose(out, ref, rtol=1e-5, atol=1e-5), (out, ref)

    # Non-aligned, multi-tile case: exercises the (row, column) grid, the
    # column-axis accumulation, padded-column masking and temperature != 1.
    mem_loss2 = jax.random.uniform(k3, (150,), jnp.float32, 0.0, 5.0)
    non_loss2 = jax.random.uniform(k4, (170,), jnp.float32, 0.0, 5.0)
    out2 = jax.block_until_ready(cus_ntxent_loss(mem_loss2, non_loss2, 0.5))
    ref2 = cus_ntxent_loss_ref(mem_loss2, non_loss2, 0.5)
    assert out2.shape == (320,)
    assert jnp.allclose(out2, ref2, rtol=1e-5, atol=1e-5), (out2, ref2)

    print("KERNEL_OK")
</pallas_src>

<mosaic_0001>
module attributes {stable_mosaic.version = 11 : i64} {
  func.func @kernel(%arg0: i32, %arg1: i32, %arg2: memref<128x1xf32, #tpu.memory_space<vmem>>, %arg3: memref<1x128xf32, #tpu.memory_space<vmem>>, %arg4: memref<128x1xf32, #tpu.memory_space<vmem>>, %arg5: memref<128x1xf32, #tpu.memory_space<vmem>>, %arg6: memref<128x1xf32, #tpu.memory_space<vmem>>) attributes {dimension_semantics = [#tpu.dimension_semantics<parallel>, #tpu.dimension_semantics<arbitrary>], iteration_bounds = array<i64: 1, 1>, scalar_prefetch = 0 : i64, scratch_operands = 2 : i64, tpu.core_type = #tpu.core_type<tc>, window_params = [{transform_indices = @transform_0, window_bounds = array<i64: 128, 1>}, {transform_indices = @transform_1, window_bounds = array<i64: 1, 128>}, {transform_indices = @transform_2, window_bounds = array<i64: 128, 1>}]} {
    %c0_i32 = arith.constant 0 : i32
    %0 = arith.cmpi eq, %arg1, %c0_i32 : i32
    %1 = arith.extui %0 : i1 to i32
    %c0_i32_0 = arith.constant 0 : i32
    %2 = arith.cmpi ne, %1, %c0_i32_0 : i32
    scf.if %2 {
      %cst_23 = arith.constant 0.000000e+00 : f32
      %63 = vector.broadcast %cst_23 : f32 to vector<128x1xf32>
      %c0_24 = arith.constant 0 : index
      %c0_25 = arith.constant 0 : index
      %64 = vector.load %arg5[%c0_24, %c0_25] : memref<128x1xf32, #tpu.memory_space<vmem>>, vector<128x1xf32>
      tpu.vector_store %arg5[%c0_24, %c0_25], %63 {strides = array<i32>} : memref<128x1xf32, #tpu.memory_space<vmem>>, vector<128x1xf32>,
      %cst_26 = arith.constant 0.000000e+00 : f32
      %65 = vector.broadcast %cst_26 : f32 to vector<128x1xf32>
      %c0_27 = arith.constant 0 : index
      %c0_28 = arith.constant 0 : index
      %66 = vector.load %arg6[%c0_27, %c0_28] : memref<128x1xf32, #tpu.memory_space<vmem>>, vector<128x1xf32>
      tpu.vector_store %arg6[%c0_27, %c0_28], %65 {strides = array<i32>} : memref<128x1xf32, #tpu.memory_space<vmem>>, vector<128x1xf32>,
    } else {
    }
    %c0 = arith.constant 0 : index
    %c0_1 = arith.constant 0 : index
    %3 = vector.load %arg2[%c0, %c0_1] : memref<128x1xf32, #tpu.memory_space<vmem>>, vector<128x1xf32>
    %c0_2 = arith.constant 0 : index
    %c0_3 = arith.constant 0 : index
    %4 = vector.load %arg3[%c0_2, %c0_3] : memref<1x128xf32, #tpu.memory_space<vmem>>, vector<1x128xf32>
    %cst = arith.constant 1.000000e-01 : f32
    %5 = vector.broadcast %cst : f32 to vector<128x1xf32>
    %6 = arith.mulf %3, %5 : vector<128x1xf32>
    %7 = math.exp %6 : vector<128x1xf32>
    %cst_4 = arith.constant -1.000000e-01 : f32
    %8 = vector.broadcast %cst_4 : f32 to vector<128x1xf32>
    %9 = arith.mulf %3, %8 : vector<128x1xf32>
    %10 = math.exp %9 : vector<128x1xf32>
    %cst_5 = arith.constant 1.000000e-01 : f32
    %11 = vector.broadcast %cst_5 : f32 to vector<1x128xf32>
    %12 = arith.mulf %4, %11 : vector<1x128xf32>
    %13 = math.exp %12 : vector<1x128xf32>
    %cst_6 = arith.constant -1.000000e-01 : f32
    %14 = vector.broadcast %cst_6 : f32 to vector<1x128xf32>
    %15 = arith.mulf %4, %14 : vector<1x128xf32>
    %16 = math.exp %15 : vector<1x128xf32>
    %17 = vector.broadcast %7 : vector<128x1xf32> to vector<128x128xf32>
    %18 = vector.broadcast %16 : vector<1x128xf32> to vector<128x128xf32>
    %19 = arith.mulf %17, %18 : vector<128x128xf32>
    %20 = vector.broadcast %10 : vector<128x1xf32> to vector<128x128xf32>
    %21 = vector.broadcast %13 : vector<1x128xf32> to vector<128x128xf32>
    %22 = arith.mulf %20, %21 : vector<128x128xf32>
    %23 = arith.minimumf %19, %22 : vector<128x128xf32>
    %cst_7 = arith.constant 1.000000e+00 : f32
    %24 = vector.broadcast %cst_7 : f32 to vector<128x128xf32>
    %25 = arith.mulf %23, %24 : vector<128x128xf32>
    %26 = math.exp %25 : vector<128x128xf32>
    %c128_i32 = arith.constant 128 : i32
    %27 = arith.muli %arg0, %c128_i32 : i32
    %28 = tpu.iota {dimensions = array<i32: 0>} : vector<128x1xi32>
    %29 = vector.broadcast %27 : i32 to vector<128x1xi32>
    %30 = arith.addi %29, %28 : vector<128x1xi32>
    %c128_i32_8 = arith.constant 128 : i32
    %31 = arith.muli %arg1, %c128_i32_8 : i32
    %32 = tpu.iota {dimensions = array<i32: 1>} : vector<1x128xi32>
    %33 = vector.broadcast %31 : i32 to vector<1x128xi32>
    %34 = arith.addi %33, %32 : vector<1x128xi32>
    %35 = vector.broadcast %30 : vector<128x1xi32> to vector<128x128xi32>
    %36 = vector.broadcast %34 : vector<1x128xi32> to vector<128x128xi32>
    %37 = arith.cmpi ne, %35, %36 : vector<128x128xi32>
    %c16_i32 = arith.constant 16 : i32
    %38 = vector.broadcast %c16_i32 : i32 to vector<1x128xi32>
    %39 = arith.cmpi slt, %34, %38 : vector<1x128xi32>
    %40 = vector.broadcast %39 : vector<1x128xi1> to vector<128x128xi1>
    %41 = arith.andi %37, %40 : vector<128x128xi1>
    %cst_9 = arith.constant 0.000000e+00 : f32
    %42 = vector.broadcast %cst_9 : f32 to vector<128x128xf32>
    %43 = arith.select %41, %26, %42 : vector<128x128xi1>, vector<128x128xf32>
    %c8_i32 = arith.constant 8 : i32
    %44 = vector.broadcast %c8_i32 : i32 to vector<1x128xi32>
    %45 = arith.cmpi slt, %34, %44 : vector<1x128xi32>
    %cst_10 = arith.constant 0.000000e+00 : f32
    %46 = vector.shape_cast %45 : vector<1x128xi1> to vector<1x128xi1>
    %47 = vector.broadcast %46 : vector<1x128xi1> to vector<128x128xi1>
    %48 = vector.broadcast %cst_10 : f32 to vector<128x128xf32>
    %49 = arith.select %47, %43, %48 : vector<128x128xi1>, vector<128x128xf32>
    %c0_11 = arith.constant 0 : index
    %c0_12 = arith.constant 0 : index
    %50 = vector.load %arg5[%c0_11, %c0_12] : memref<128x1xf32, #tpu.memory_space<vmem>>, vector<128x1xf32>
    %cst_13 = arith.constant dense<0.000000e+00> : vector<128xf32>
    %51 = vector.multi_reduction <add>, %49, %cst_13 [1] : vector<128x128xf32> to vector<128xf32>
    %52 = vector.shape_cast %51 : vector<128xf32> to vector<128x1xf32>
    %53 = arith.addf %50, %52 : vector<128x1xf32>
    %c0_14 = arith.constant 0 : index
    %c0_15 = arith.constant 0 : index
    %54 = vector.load %arg5[%c0_14, %c0_15] : memref<128x1xf32, #tpu.memory_space<vmem>>, vector<128x1xf32>
    tpu.vector_store %arg5[%c0_14, %c0_15], %53 {strides = array<i32>} : memref<128x1xf32, #tpu.memory_space<vmem>>, vector<128x1xf32>,
    %c0_16 = arith.constant 0 : index
    %c0_17 = arith.constant 0 : index
    %55 = vector.load %arg6[%c0_16, %c0_17] : memref<128x1xf32, #tpu.memory_space<vmem>>, vector<128x1xf32>
    %cst_18 = arith.constant dense<0.000000e+00> : vector<128xf32>
    %56 = vector.multi_reduction <add>, %43, %cst_18 [1] : vector<128x128xf32> to vector<128xf32>
    %57 = vector.shape_cast %56 : vector<128xf32> to vector<128x1xf32>
    %58 = arith.addf %55, %57 : vector<128x1xf32>
    %c0_19 = arith.constant 0 : index
    %c0_20 = arith.constant 0 : index
    %59 = vector.load %arg6[%c0_19, %c0_20] : memref<128x1xf32, #tpu.memory_space<vmem>>, vector<128x1xf32>
    tpu.vector_store %arg6[%c0_19, %c0_20], %58 {strides = array<i32>} : memref<128x1xf32, #tpu.memory_space<vmem>>, vector<128x1xf32>,
    %c0_i32_21 = arith.constant 0 : i32
    %60 = arith.cmpi eq, %arg1, %c0_i32_21 : i32
    %61 = arith.extui %60 : i1 to i32
    %c0_i32_22 = arith.constant 0 : i32
    %62 = arith.cmpi ne, %61, %c0_i32_22 : i32
    scf.if %62 {
      %c0_23 = arith.constant 0 : index
      %c0_24 = arith.constant 0 : index
      %63 = vector.load %arg5[%c0_23, %c0_24] : memref<128x1xf32, #tpu.memory_space<vmem>>, vector<128x1xf32>
      %c0_25 = arith.constant 0 : index
      %c0_26 = arith.constant 0 : index
      %64 = vector.load %arg6[%c0_25, %c0_26] : memref<128x1xf32, #tpu.memory_space<vmem>>, vector<128x1xf32>
      %c8_i32_27 = arith.constant 8 : i32
      %65 = vector.broadcast %c8_i32_27 : i32 to vector<128x1xi32>
      %66 = arith.cmpi slt, %30, %65 : vector<128x1xi32>
      %67 = arith.subf %64, %63 : vector<128x1xf32>
      %68 = arith.select %66, %63, %67 : vector<128x1xi1>, vector<128x1xf32>
      %69 = math.log %64 : vector<128x1xf32>
      %70 = math.log %68 : vector<128x1xf32>
      %71 = arith.subf %69, %70 : vector<128x1xf32>
      %c0_28 = arith.constant 0 : index
      %c0_29 = arith.constant 0 : index
      %72 = vector.load %arg4[%c0_28, %c0_29] : memref<128x1xf32, #tpu.memory_space<vmem>>, vector<128x1xf32>
      tpu.vector_store %arg4[%c0_28, %c0_29], %71 {strides = array<i32>} : memref<128x1xf32, #tpu.memory_space<vmem>>, vector<128x1xf32>,
    } else {
    }
    return
  }
  func.func @transform_0(%arg0: i32, %arg1: i32) -> (i32, i32) {
    %c0_i32 = arith.constant 0 : i32
    %c0_i32_0 = arith.constant 0 : i32
    return %arg0, %c0_i32 : i32, i32
  }
  func.func @transform_1(%arg0: i32, %arg1: i32) -> (i32, i32) {
    %c0_i32 = arith.constant 0 : i32
    %c0_i32_0 = arith.constant 0 : i32
    return %c0_i32, %arg1 : i32, i32
  }
  func.func @transform_2(%arg0: i32, %arg1: i32) -> (i32, i32) {
    %c0_i32 = arith.constant 0 : i32
    %c0_i32_0 = arith.constant 0 : i32
    return %arg0, %c0_i32 : i32, i32
  }
}

</mosaic_0001>

<llo_original>
// kernel: tpu_custom_call.1
$region0: #{tpu_custom_call.1}
  #allocation0 [shape = 'u32[]', space=smem, size = 0x4, offset = 0x4, fixed_abs, tag = 'smem constant byte address 0x4 - core index']
  #allocation1 [shape = 'u32[144,128]{1,0:T(1,128)}', space=vmem, size = 0x12000, scoped, tag = 'internal scratch']
  #allocation2 [shape = 'f32[128,1]{1,0:T(8,128)}', space=vmem, size = 0x10000, scoped, tag = 'scratch operand']
  #allocation3 [shape = 'f32[128,1]{1,0:T(8,128)}', space=vmem, size = 0x10000, scoped, tag = 'scratch operand']
  %s0 = inlined_call_operand.vmem [shape: f32[128,1], index: 0, kind: input, shape index: {}]
  %s1 = inlined_call_operand.vmem [shape: f32[1,128], index: 1, kind: input, shape index: {}]
  %s2 = inlined_call_operand.vmem [shape: f32[128,1], index: 2, kind: output, shape index: {}]
  %s3 = sld [smem:[#allocation0]]
  $region26: #{tpu_custom_call.1} parent=0
    _
  %s5 = ssub.s32 1, %s3
  %s6 = scalar_select 0, %s5, %s3
  // Predicated region
  $region2: #{tpu_custom_call.1} parent=0 // pred_check
    _
  $region3: #{tpu_custom_call.1} parent=0 // pred_check_branch
    %8 = sbr.rel (0) target = $region5
  $region4: #{tpu_custom_call.1} parent=0 // pred_region
    _
  $region5: #{tpu_custom_call.1} parent=0 // pred_fallthru
    _
  // Predicated region
  $region6: #{tpu_custom_call.1} parent=0 // pred_check
    _
  $region7: #{tpu_custom_call.1} parent=0 // pred_check_branch
    %10 = sbr.rel (0) target = $region9
  $region8: #{tpu_custom_call.1} parent=0 // pred_region
    _
  $region9: #{tpu_custom_call.1} parent=0 // pred_fallthru
    _
  %p11 = scmp.eq.s32.totalorder 0, 0
  // Predicated region
  $region10: #{tpu_custom_call.1} parent=0 // pred_check
    %p12 = pneg %p11
  $region11: #{tpu_custom_call.1} parent=0 // pred_check_branch
    %14 = sbr.rel (%p12) target = $region13
  $region12: #{tpu_custom_call.1} parent=0 // pred_region
    %vm15 = vcmask 7168
    %16 = vst.msk [vmem:[#allocation2] sm:$0xff] %vm15, 0.0
    %17 = vst.msk [vmem:[#allocation2 + $0x8] sm:$0xff] %vm15, 0.0
    %18 = vst.msk [vmem:[#allocation2 + $0x10] sm:$0xff] %vm15, 0.0
    %19 = vst.msk [vmem:[#allocation2 + $0x18] sm:$0xff] %vm15, 0.0
    %20 = vst.msk [vmem:[#allocation2 + $0x20] sm:$0xff] %vm15, 0.0
    %21 = vst.msk [vmem:[#allocation2 + $0x28] sm:$0xff] %vm15, 0.0
    %22 = vst.msk [vmem:[#allocation2 + $0x30] sm:$0xff] %vm15, 0.0
    %23 = vst.msk [vmem:[#allocation2 + $0x38] sm:$0xff] %vm15, 0.0
    %24 = vst.msk [vmem:[#allocation2 + $0x40] sm:$0xff] %vm15, 0.0
    %25 = vst.msk [vmem:[#allocation2 + $0x48] sm:$0xff] %vm15, 0.0
    %26 = vst.msk [vmem:[#allocation2 + $0x50] sm:$0xff] %vm15, 0.0
    %27 = vst.msk [vmem:[#allocation2 + $0x58] sm:$0xff] %vm15, 0.0
    %28 = vst.msk [vmem:[#allocation2 + $0x60] sm:$0xff] %vm15, 0.0
    %29 = vst.msk [vmem:[#allocation2 + $0x68] sm:$0xff] %vm15, 0.0
    %30 = vst.msk [vmem:[#allocation2 + $0x70] sm:$0xff] %vm15, 0.0
    %31 = vst.msk [vmem:[#allocation2 + $0x78] sm:$0xff] %vm15, 0.0
    %32 = vst.msk [vmem:[#allocation3] sm:$0xff] %vm15, 0.0
    %33 = vst.msk [vmem:[#allocation3 + $0x8] sm:$0xff] %vm15, 0.0
    %34 = vst.msk [vmem:[#allocation3 + $0x10] sm:$0xff] %vm15, 0.0
    %35 = vst.msk [vmem:[#allocation3 + $0x18] sm:$0xff] %vm15, 0.0
    %36 = vst.msk [vmem:[#allocation3 + $0x20] sm:$0xff] %vm15, 0.0
    %37 = vst.msk [vmem:[#allocation3 + $0x28] sm:$0xff] %vm15, 0.0
    %38 = vst.msk [vmem:[#allocation3 + $0x30] sm:$0xff] %vm15, 0.0
    %39 = vst.msk [vmem:[#allocation3 + $0x38] sm:$0xff] %vm15, 0.0
    %40 = vst.msk [vmem:[#allocation3 + $0x40] sm:$0xff] %vm15, 0.0
    %41 = vst.msk [vmem:[#allocation3 + $0x48] sm:$0xff] %vm15, 0.0
    %42 = vst.msk [vmem:[#allocation3 + $0x50] sm:$0xff] %vm15, 0.0
    %43 = vst.msk [vmem:[#allocation3 + $0x58] sm:$0xff] %vm15, 0.0
    %44 = vst.msk [vmem:[#allocation3 + $0x60] sm:$0xff] %vm15, 0.0
    %45 = vst.msk [vmem:[#allocation3 + $0x68] sm:$0xff] %vm15, 0.0
    %46 = vst.msk [vmem:[#allocation3 + $0x70] sm:$0xff] %vm15, 0.0
    %47 = vst.msk [vmem:[#allocation3 + $0x78] sm:$0xff] %vm15, 0.0
  $region13: #{tpu_custom_call.1} parent=0 // pred_fallthru
    _
  %v48 = vld [vmem:[%s0] sm:$0xff]
  %v49 = vld [vmem:[%s0 + $0x8] sm:$0xff]
  %v50 = vld [vmem:[%s0 + $0x10] sm:$0xff]
  %v51 = vld [vmem:[%s0 + $0x18] sm:$0xff]
  %v52 = vld [vmem:[%s0 + $0x20] sm:$0xff]
  %v53 = vld [vmem:[%s0 + $0x28] sm:$0xff]
  %v54 = vld [vmem:[%s0 + $0x30] sm:$0xff]
  %v55 = vld [vmem:[%s0 + $0x38] sm:$0xff]
  %v56 = vld [vmem:[%s0 + $0x40] sm:$0xff]
  %v57 = vld [vmem:[%s0 + $0x48] sm:$0xff]
  %v58 = vld [vmem:[%s0 + $0x50] sm:$0xff]
  %v59 = vld [vmem:[%s0 + $0x58] sm:$0xff]
  %v60 = vld [vmem:[%s0 + $0x60] sm:$0xff]
  %v61 = vld [vmem:[%s0 + $0x68] sm:$0xff]
  %v62 = vld [vmem:[%s0 + $0x70] sm:$0xff]
  %v63 = vld [vmem:[%s0 + $0x78] sm:$0xff]
  %v64 = vld [vmem:[%s1] sm:$0x1]
  %v65 = vmul.f32 %v48, 0.1
  %v66 = vmul.f32 %v49, 0.1
  %v67 = vmul.f32 %v50, 0.1
  %v68 = vmul.f32 %v51, 0.1
  %v69 = vmul.f32 %v52, 0.1
  %v70 = vmul.f32 %v53, 0.1
  %v71 = vmul.f32 %v54, 0.1
  %v72 = vmul.f32 %v55, 0.1
  %v73 = vmul.f32 %v56, 0.1
  %v74 = vmul.f32 %v57, 0.1
  %v75 = vmul.f32 %v58, 0.1
  %v76 = vmul.f32 %v59, 0.1
  %v77 = vmul.f32 %v60, 0.1
  %v78 = vmul.f32 %v61, 0.1
  %v79 = vmul.f32 %v62, 0.1
  %v80 = vmul.f32 %v63, 0.1
  %v81 = vmul.f32 %v65, 1.442695
  %v82 = vpow.pop %v81
  %v83 = vmul.f32 %v66, 1.442695
  %v84 = vpow.pop %v83
  %v85 = vmul.f32 %v67, 1.442695
  %v86 = vpow.pop %v85
  %v87 = vmul.f32 %v68, 1.442695
  %v88 = vpow.pop %v87
  %v89 = vmul.f32 %v69, 1.442695
  %v90 = vpow.pop %v89
  %v91 = vmul.f32 %v70, 1.442695
  %v92 = vpow.pop %v91
  %v93 = vmul.f32 %v71, 1.442695
  %v94 = vpow.pop %v93
  %v95 = vmul.f32 %v72, 1.442695
  %v96 = vpow.pop %v95
  %v97 = vmul.f32 %v73, 1.442695
  %v98 = vpow.pop %v97
  %v99 = vmul.f32 %v74, 1.442695
  %v100 = vpow.pop %v99
  %v101 = vmul.f32 %v75, 1.442695
  %v102 = vpow.pop %v101
  %v103 = vmul.f32 %v76, 1.442695
  %v104 = vpow.pop %v103
  %v105 = vmul.f32 %v77, 1.442695
  %v106 = vpow.pop %v105
  %v107 = vmul.f32 %v78, 1.442695
  %v108 = vpow.pop %v107
  %v109 = vmul.f32 %v79, 1.442695
  %v110 = vpow.pop %v109
  %v111 = vmul.f32 %v80, 1.442695
  %v112 = vpow.pop %v111
  %v113 = vmul.f32 %v48, -0.1
  %v114 = vmul.f32 %v49, -0.1
  %v115 = vmul.f32 %v50, -0.1
  %v116 = vmul.f32 %v51, -0.1
  %v117 = vmul.f32 %v52, -0.1
  %v118 = vmul.f32 %v53, -0.1
  %v119 = vmul.f32 %v54, -0.1
  %v120 = vmul.f32 %v55, -0.1
  %v121 = vmul.f32 %v56, -0.1
  %v122 = vmul.f32 %v57, -0.1
  %v123 = vmul.f32 %v58, -0.1
  %v124 = vmul.f32 %v59, -0.1
  %v125 = vmul.f32 %v60, -0.1
  %v126 = vmul.f32 %v61, -0.1
  %v127 = vmul.f32 %v62, -0.1
  %v128 = vmul.f32 %v63, -0.1
  %v129 = vmul.f32 %v113, 1.442695
  %v130 = vpow.pop %v129
  %v131 = vmul.f32 %v114, 1.442695
  %v132 = vpow.pop %v131
  %v133 = vmul.f32 %v115, 1.442695
  %v134 = vpow.pop %v133
  %v135 = vmul.f32 %v116, 1.442695
  %v136 = vpow.pop %v135
  %v137 = vmul.f32 %v117, 1.442695
  %v138 = vpow.pop %v137
  %v139 = vmul.f32 %v118, 1.442695
  %v140 = vpow.pop %v139
  %v141 = vmul.f32 %v119, 1.442695
  %v142 = vpow.pop %v141
  %v143 = vmul.f32 %v120, 1.442695
  %v144 = vpow.pop %v143
  %v145 = vmul.f32 %v121, 1.442695
  %v146 = vpow.pop %v145
  %v147 = vmul.f32 %v122, 1.442695
  %v148 = vpow.pop %v147
  %v149 = vmul.f32 %v123, 1.442695
  %v150 = vpow.pop %v149
  %v151 = vmul.f32 %v124, 1.442695
  %v152 = vpow.pop %v151
  %v153 = vmul.f32 %v125, 1.442695
  %v154 = vpow.pop %v153
  %v155 = vmul.f32 %v126, 1.442695
  %v156 = vpow.pop %v155
  %v157 = vmul.f32 %v127, 1.442695
  %v158 = vpow.pop %v157
  %v159 = vmul.f32 %v128, 1.442695
  %v160 = vpow.pop %v159
  %v161 = vmul.f32 %v64, 0.1
  %v162 = vmul.f32 %v161, 1.442695
  %v163 = vpow.pop %v162
  %v164 = vmul.f32 %v64, -0.1
  %v165 = vmul.f32 %v164, 1.442695
  %v166 = vpow.pop %v165
  %168 = vset.pattern.permute.xlu0 0
  %169 = vperm.xlu0 %168, %v82
  %v170 = vpop.permute.xlu0 %169
  %173 = vset.pattern.permute.xlu0 0
  %174 = vperm.xlu0 %173, %v84
  %v175 = vpop.permute.xlu0 %174
  %178 = vset.pattern.permute.xlu0 0
  %179 = vperm.xlu0 %178, %v86
  %v180 = vpop.permute.xlu0 %179
  %183 = vset.pattern.permute.xlu0 0
  %184 = vperm.xlu0 %183, %v88
  %v185 = vpop.permute.xlu0 %184
  %188 = vset.pattern.permute.xlu0 0
  %189 = vperm.xlu0 %188, %v90
  %v190 = vpop.permute.xlu0 %189
  %193 = vset.pattern.permute.xlu0 0
  %194 = vperm.xlu0 %193, %v92
  %v195 = vpop.permute.xlu0 %194
  %198 = vset.pattern.permute.xlu0 0
  %199 = vperm.xlu0 %198, %v94
  %v200 = vpop.permute.xlu0 %199
  %203 = vset.pattern.permute.xlu0 0
  %204 = vperm.xlu0 %203, %v96
  %v205 = vpop.permute.xlu0 %204
  %208 = vset.pattern.permute.xlu0 0
  %209 = vperm.xlu0 %208, %v98
  %v210 = vpop.permute.xlu0 %209
  %213 = vset.pattern.permute.xlu0 0
  %214 = vperm.xlu0 %213, %v100
  %v215 = vpop.permute.xlu0 %214
  %218 = vset.pattern.permute.xlu0 0
  %219 = vperm.xlu0 %218, %v102
  %v220 = vpop.permute.xlu0 %219
  %223 = vset.pattern.permute.xlu0 0
  %224 = vperm.xlu0 %223, %v104
  %v225 = vpop.permute.xlu0 %224
  %228 = vset.pattern.permute.xlu0 0
  %229 = vperm.xlu0 %228, %v106
  %v230 = vpop.permute.xlu0 %229
  %233 = vset.pattern.permute.xlu0 0
  %234 = vperm.xlu0 %233, %v108
  %v235 = vpop.permute.xlu0 %234
  %238 = vset.pattern.permute.xlu0 0
  %239 = vperm.xlu0 %238, %v110
  %v240 = vpop.permute.xlu0 %239
  %243 = vset.pattern.permute.xlu0 0
  %244 = vperm.xlu0 %243, %v112
  %v245 = vpop.permute.xlu0 %244
  %v248 = vlaneseq
  %v249 = vshrl.u32 %v248, 7
  %v250 = vsub.s32 0, %v249
  %v251 = vrot.slane %v166, %v250
  %v253 = vmul.f32 %v170, %v251
  %v254 = vmul.f32 %v175, %v251
  %v255 = vmul.f32 %v180, %v251
  %v256 = vmul.f32 %v185, %v251
  %v257 = vmul.f32 %v190, %v251
  %v258 = vmul.f32 %v195, %v251
  %v259 = vmul.f32 %v200, %v251
  %v260 = vmul.f32 %v205, %v251
  %v261 = vmul.f32 %v210, %v251
  %v262 = vmul.f32 %v215, %v251
  %v263 = vmul.f32 %v220, %v251
  %v264 = vmul.f32 %v225, %v251
  %v265 = vmul.f32 %v230, %v251
  %v266 = vmul.f32 %v235, %v251
  %v267 = vmul.f32 %v240, %v251
  %v268 = vmul.f32 %v245, %v251
  %270 = vset.pattern.permute.xlu0 0
  %271 = vperm.xlu0 %270, %v130
  %v272 = vpop.permute.xlu0 %271
  %275 = vset.pattern.permute.xlu0 0
  %276 = vperm.xlu0 %275, %v132
  %v277 = vpop.permute.xlu0 %276
  %280 = vset.pattern.permute.xlu0 0
  %281 = vperm.xlu0 %280, %v134
  %v282 = vpop.permute.xlu0 %281
  %285 = vset.pattern.permute.xlu0 0
  %286 = vperm.xlu0 %285, %v136
  %v287 = vpop.permute.xlu0 %286
  %290 = vset.pattern.permute.xlu0 0
  %291 = vperm.xlu0 %290, %v138
  %v292 = vpop.permute.xlu0 %291
  %295 = vset.pattern.permute.xlu0 0
  %296 = vperm.xlu0 %295, %v140
  %v297 = vpop.permute.xlu0 %296
  %300 = vset.pattern.permute.xlu0 0
  %301 = vperm.xlu0 %300, %v142
  %v302 = vpop.permute.xlu0 %301
  %305 = vset.pattern.permute.xlu0 0
  %306 = vperm.xlu0 %305, %v144
  %v307 = vpop.permute.xlu0 %306
  %310 = vset.pattern.permute.xlu0 0
  %311 = vperm.xlu0 %310, %v146
  %v312 = vpop.permute.xlu0 %311
  %315 = vset.pattern.permute.xlu0 0
  %316 = vperm.xlu0 %315, %v148
  %v317 = vpop.permute.xlu0 %316
  %320 = vset.pattern.permute.xlu0 0
  %321 = vperm.xlu0 %320, %v150
  %v322 = vpop.permute.xlu0 %321
  %325 = vset.pattern.permute.xlu0 0
  %326 = vperm.xlu0 %325, %v152
  %v327 = vpop.permute.xlu0 %326
  %330 = vset.pattern.permute.xlu0 0
  %331 = vperm.xlu0 %330, %v154
  %v332 = vpop.permute.xlu0 %331
  %335 = vset.pattern.permute.xlu0 0
  %336 = vperm.xlu0 %335, %v156
  %v337 = vpop.permute.xlu0 %336
  %340 = vset.pattern.permute.xlu0 0
  %341 = vperm.xlu0 %340, %v158
  %v342 = vpop.permute.xlu0 %341
  %345 = vset.pattern.permute.xlu0 0
  %346 = vperm.xlu0 %345, %v160
  %v347 = vpop.permute.xlu0 %346
  %v350 = vlaneseq
  %v351 = vshrl.u32 %v350, 7
  %v352 = vsub.s32 0, %v351
  %v353 = vrot.slane %v163, %v352
  %v355 = vmul.f32 %v272, %v353
  %v356 = vmul.f32 %v277, %v353
  %v357 = vmul.f32 %v282, %v353
  %v358 = vmul.f32 %v287, %v353
  %v359 = vmul.f32 %v292, %v353
  %v360 = vmul.f32 %v297, %v353
  %v361 = vmul.f32 %v302, %v353
  %v362 = vmul.f32 %v307, %v353
  %v363 = vmul.f32 %v312, %v353
  %v364 = vmul.f32 %v317, %v353
  %v365 = vmul.f32 %v322, %v353
  %v366 = vmul.f32 %v327, %v353
  %v367 = vmul.f32 %v332, %v353
  %v368 = vmul.f32 %v337, %v353
  %v369 = vmul.f32 %v342, %v353
  %v370 = vmul.f32 %v347, %v353
  %v371 = vmin.f32 %v253, %v355
  %v372 = vmin.f32 %v254, %v356
  %v373 = vmin.f32 %v255, %v357
  %v374 = vmin.f32 %v256, %v358
  %v375 = vmin.f32 %v257, %v359
  %v376 = vmin.f32 %v258, %v360
  %v377 = vmin.f32 %v259, %v361
  %v378 = vmin.f32 %v260, %v362
  %v379 = vmin.f32 %v261, %v363
  %v380 = vmin.f32 %v262, %v364
  %v381 = vmin.f32 %v263, %v365
  %v382 = vmin.f32 %v264, %v366
  %v383 = vmin.f32 %v265, %v367
  %v384 = vmin.f32 %v266, %v368
  %v385 = vmin.f32 %v267, %v369
  %v386 = vmin.f32 %v268, %v370
  %v387 = vmul.f32 %v371, 1.442695
  %v388 = vpow.pop %v387
  %v389 = vmul.f32 %v372, 1.442695
  %v390 = vpow.pop %v389
  %v391 = vmul.f32 %v373, 1.442695
  %v392 = vpow.pop %v391
  %v393 = vmul.f32 %v374, 1.442695
  %v394 = vpow.pop %v393
  %v395 = vmul.f32 %v375, 1.442695
  %v396 = vpow.pop %v395
  %v397 = vmul.f32 %v376, 1.442695
  %v398 = vpow.pop %v397
  %v399 = vmul.f32 %v377, 1.442695
  %v400 = vpow.pop %v399
  %v401 = vmul.f32 %v378, 1.442695
  %v402 = vpow.pop %v401
  %v403 = vmul.f32 %v379, 1.442695
  %v404 = vpow.pop %v403
  %v405 = vmul.f32 %v380, 1.442695
  %v406 = vpow.pop %v405
  %v407 = vmul.f32 %v381, 1.442695
  %v408 = vpow.pop %v407
  %v409 = vmul.f32 %v382, 1.442695
  %v410 = vpow.pop %v409
  %v411 = vmul.f32 %v383, 1.442695
  %v412 = vpow.pop %v411
  %v413 = vmul.f32 %v384, 1.442695
  %v414 = vpow.pop %v413
  %v415 = vmul.f32 %v385, 1.442695
  %v416 = vpow.pop %v415
  %v417 = vmul.f32 %v386, 1.442695
  %v418 = vpow.pop %v417
  %s419 = smul.u32 0, 128
  %v420 = vlaneseq
  %v421 = vshrl.u32 %v420, 7
  %v422 = vadd.s32 %v421, 8
  %v423 = vadd.s32 %v421, 16
  %v424 = vadd.s32 %v421, 24
  %v425 = vadd.s32 %v421, 32
  %v426 = vadd.s32 %v421, 40
  %v427 = vadd.s32 %v421, 48
  %v428 = vadd.s32 %v421, 56
  %v429 = vadd.s32 %v421, 64
  %v430 = vadd.s32 %v421, 72
  %v431 = vadd.s32 %v421, 80
  %v432 = vadd.s32 %v421, 88
  %v433 = vadd.s32 %v421, 96
  %v434 = vadd.s32 %v421, 104
  %v435 = vadd.s32 %v421, 112
  %v436 = vadd.s32 %v421, 120
  %v437 = vstv %s419
  %v438 = vadd.s32 %v437, %v421
  %v439 = vadd.s32 %v437, %v422
  %v440 = vadd.s32 %v437, %v423
  %v441 = vadd.s32 %v437, %v424
  %v442 = vadd.s32 %v437, %v425
  %v443 = vadd.s32 %v437, %v426
  %v444 = vadd.s32 %v437, %v427
  %v445 = vadd.s32 %v437, %v428
  %v446 = vadd.s32 %v437, %v429
  %v447 = vadd.s32 %v437, %v430
  %v448 = vadd.s32 %v437, %v431
  %v449 = vadd.s32 %v437, %v432
  %v450 = vadd.s32 %v437, %v433
  %v451 = vadd.s32 %v437, %v434
  %v452 = vadd.s32 %v437, %v435
  %v453 = vadd.s32 %v437, %v436
  %s454 = smul.u32 0, 128
  %v455 = vlaneseq
  %v456 = vand.u32 %v455, 127
  %v457 = vstv %s454
  %v458 = vadd.s32 %v457, %v456
  %vm459 = vcmp.ne.s32.totalorder %v438, %v458
  %vm460 = vcmp.ne.s32.totalorder %v439, %v458
  %vm461 = vcmp.ne.s32.totalorder %v440, %v458
  %vm462 = vcmp.ne.s32.totalorder %v441, %v458
  %vm463 = vcmp.ne.s32.totalorder %v442, %v458
  %vm464 = vcmp.ne.s32.totalorder %v443, %v458
  %vm465 = vcmp.ne.s32.totalorder %v444, %v458
  %vm466 = vcmp.ne.s32.totalorder %v445, %v458
  %vm467 = vcmp.ne.s32.totalorder %v446, %v458
  %vm468 = vcmp.ne.s32.totalorder %v447, %v458
  %vm469 = vcmp.ne.s32.totalorder %v448, %v458
  %vm470 = vcmp.ne.s32.totalorder %v449, %v458
  %vm471 = vcmp.ne.s32.totalorder %v450, %v458
  %vm472 = vcmp.ne.s32.totalorder %v451, %v458
  %vm473 = vcmp.ne.s32.totalorder %v452, %v458
  %vm474 = vcmp.ne.s32.totalorder %v453, %v458
  %vm475 = vcmp.lt.s32.totalorder %v458, 16
  %v476 = vsel %vm475, 1, 0
  %vm477 = vcmp.eq.s32.totalorder %v476, 1
  %vm478 = vmand %vm459, %vm477
  %vm479 = vmand %vm460, %vm477
  %vm480 = vmand %vm461, %vm477
  %vm481 = vmand %vm462, %vm477
  %vm482 = vmand %vm463, %vm477
  %vm483 = vmand %vm464, %vm477
  %vm484 = vmand %vm465, %vm477
  %vm485 = vmand %vm466, %vm477
  %vm486 = vmand %vm467, %vm477
  %vm487 = vmand %vm468, %vm477
  %vm488 = vmand %vm469, %vm477
  %vm489 = vmand %vm470, %vm477
  %vm490 = vmand %vm471, %vm477
  %vm491 = vmand %vm472, %vm477
  %vm492 = vmand %vm473, %vm477
  %vm493 = vmand %vm474, %vm477
  %v494 = vsel %vm478, %v388, 0.0
  %v495 = vsel %vm479, %v390, 0.0
  %v496 = vsel %vm480, %v392, 0.0
  %v497 = vsel %vm481, %v394, 0.0
  %v498 = vsel %vm482, %v396, 0.0
  %v499 = vsel %vm483, %v398, 0.0
  %v500 = vsel %vm484, %v400, 0.0
  %v501 = vsel %vm485, %v402, 0.0
  %v502 = vsel %vm486, %v404, 0.0
  %v503 = vsel %vm487, %v406, 0.0
  %v504 = vsel %vm488, %v408, 0.0
  %v505 = vsel %vm489, %v410, 0.0
  %v506 = vsel %vm490, %v412, 0.0
  %v507 = vsel %vm491, %v414, 0.0
  %v508 = vsel %vm492, %v416, 0.0
  %v509 = vsel %vm493, %v418, 0.0
  %vm510 = vcmp.lt.s32.totalorder %v458, 8
  %v511 = vsel %vm510, 1, 0
  %vm512 = vcmp.eq.s32.totalorder %v511, 1
  %v513 = vsel %vm512, %v494, 0.0
  %v514 = vsel %vm512, %v495, 0.0
  %v515 = vsel %vm512, %v496, 0.0
  %v516 = vsel %vm512, %v497, 0.0
  %v517 = vsel %vm512, %v498, 0.0
  %v518 = vsel %vm512, %v499, 0.0
  %v519 = vsel %vm512, %v500, 0.0
  %v520 = vsel %vm512, %v501, 0.0
  %v521 = vsel %vm512, %v502, 0.0
  %v522 = vsel %vm512, %v503, 0.0
  %v523 = vsel %vm512, %v504, 0.0
  %v524 = vsel %vm512, %v505, 0.0
  %v525 = vsel %vm512, %v506, 0.0
  %v526 = vsel %vm512, %v507, 0.0
  %v527 = vsel %vm512, %v508, 0.0
  %v528 = vsel %vm512, %v509, 0.0
  %v529 = vld [vmem:[#allocation2] sm:$0xff]
  %v530 = vld [vmem:[#allocation2 + $0x8] sm:$0xff]
  %v531 = vld [vmem:[#allocation2 + $0x10] sm:$0xff]
  %v532 = vld [vmem:[#allocation2 + $0x18] sm:$0xff]
  %v533 = vld [vmem:[#allocation2 + $0x20] sm:$0xff]
  %v534 = vld [vmem:[#allocation2 + $0x28] sm:$0xff]
  %v535 = vld [vmem:[#allocation2 + $0x30] sm:$0xff]
  %v536 = vld [vmem:[#allocation2 + $0x38] sm:$0xff]
  %v537 = vld [vmem:[#allocation2 + $0x40] sm:$0xff]
  %v538 = vld [vmem:[#allocation2 + $0x48] sm:$0xff]
  %v539 = vld [vmem:[#allocation2 + $0x50] sm:$0xff]
  %v540 = vld [vmem:[#allocation2 + $0x58] sm:$0xff]
  %v541 = vld [vmem:[#allocation2 + $0x60] sm:$0xff]
  %v542 = vld [vmem:[#allocation2 + $0x68] sm:$0xff]
  %v543 = vld [vmem:[#allocation2 + $0x70] sm:$0xff]
  %v544 = vld [vmem:[#allocation2 + $0x78] sm:$0xff]
  %545 = vadd.xlane.f32.xlu0 %v513
  %v546 = vpop.xlane.xlu0 %545
  %547 = vadd.xlane.f32.xlu0 %v514
  %v548 = vpop.xlane.xlu0 %547
  %549 = vadd.xlane.f32.xlu0 %v515
  %v550 = vpop.xlane.xlu0 %549
  %551 = vadd.xlane.f32.xlu0 %v516
  %v552 = vpop.xlane.xlu0 %551
  %553 = vadd.xlane.f32.xlu0 %v517
  %v554 = vpop.xlane.xlu0 %553
  %555 = vadd.xlane.f32.xlu0 %v518
  %v556 = vpop.xlane.xlu0 %555
  %557 = vadd.xlane.f32.xlu0 %v519
  %v558 = vpop.xlane.xlu0 %557
  %559 = vadd.xlane.f32.xlu0 %v520
  %v560 = vpop.xlane.xlu0 %559
  %561 = vadd.xlane.f32.xlu0 %v521
  %v562 = vpop.xlane.xlu0 %561
  %563 = vadd.xlane.f32.xlu0 %v522
  %v564 = vpop.xlane.xlu0 %563
  %565 = vadd.xlane.f32.xlu0 %v523
  %v566 = vpop.xlane.xlu0 %565
  %567 = vadd.xlane.f32.xlu0 %v524
  %v568 = vpop.xlane.xlu0 %567
  %569 = vadd.xlane.f32.xlu0 %v525
  %v570 = vpop.xlane.xlu0 %569
  %571 = vadd.xlane.f32.xlu0 %v526
  %v572 = vpop.xlane.xlu0 %571
  %573 = vadd.xlane.f32.xlu0 %v527
  %v574 = vpop.xlane.xlu0 %573
  %575 = vadd.xlane.f32.xlu0 %v528
  %v576 = vpop.xlane.xlu0 %575
  %v577 = vadd.f32 %v529, %v546
  %v578 = vadd.f32 %v530, %v548
  %v579 = vadd.f32 %v531, %v550
  %v580 = vadd.f32 %v532, %v552
  %v581 = vadd.f32 %v533, %v554
  %v582 = vadd.f32 %v534, %v556
  %v583 = vadd.f32 %v535, %v558
  %v584 = vadd.f32 %v536, %v560
  %v585 = vadd.f32 %v537, %v562
  %v586 = vadd.f32 %v538, %v564
  %v587 = vadd.f32 %v539, %v566
  %v588 = vadd.f32 %v540, %v568
  %v589 = vadd.f32 %v541, %v570
  %v590 = vadd.f32 %v542, %v572
  %v591 = vadd.f32 %v543, %v574
  %v592 = vadd.f32 %v544, %v576
  %vm593 = vcmask 7168
  %594 = vst.msk [vmem:[#allocation2] sm:$0xff] %vm593, %v577
  %595 = vst.msk [vmem:[#allocation2 + $0x8] sm:$0xff] %vm593, %v578
  %596 = vst.msk [vmem:[#allocation2 + $0x10] sm:$0xff] %vm593, %v579
  %597 = vst.msk [vmem:[#allocation2 + $0x18] sm:$0xff] %vm593, %v580
  %598 = vst.msk [vmem:[#allocation2 + $0x20] sm:$0xff] %vm593, %v581
  %599 = vst.msk [vmem:[#allocation2 + $0x28] sm:$0xff] %vm593, %v582
  %600 = vst.msk [vmem:[#allocation2 + $0x30] sm:$0xff] %vm593, %v583
  %601 = vst.msk [vmem:[#allocation2 + $0x38] sm:$0xff] %vm593, %v584
  %602 = vst.msk [vmem:[#allocation2 + $0x40] sm:$0xff] %vm593, %v585
  %603 = vst.msk [vmem:[#allocation2 + $0x48] sm:$0xff] %vm593, %v586
  %604 = vst.msk [vmem:[#allocation2 + $0x50] sm:$0xff] %vm593, %v587
  %605 = vst.msk [vmem:[#allocation2 + $0x58] sm:$0xff] %vm593, %v588
  %606 = vst.msk [vmem:[#allocation2 + $0x60] sm:$0xff] %vm593, %v589
  %607 = vst.msk [vmem:[#allocation2 + $0x68] sm:$0xff] %vm593, %v590
  %608 = vst.msk [vmem:[#allocation2 + $0x70] sm:$0xff] %vm593, %v591
  %609 = vst.msk [vmem:[#allocation2 + $0x78] sm:$0xff] %vm593, %v592
  %v610 = vld [vmem:[#allocation3] sm:$0xff]
  %v611 = vld [vmem:[#allocation3 + $0x8] sm:$0xff]
  %v612 = vld [vmem:[#allocation3 + $0x10] sm:$0xff]
  %v613 = vld [vmem:[#allocation3 + $0x18] sm:$0xff]
  %v614 = vld [vmem:[#allocation3 + $0x20] sm:$0xff]
  %v615 = vld [vmem:[#allocation3 + $0x28] sm:$0xff]
  %v616 = vld [vmem:[#allocation3 + $0x30] sm:$0xff]
  %v617 = vld [vmem:[#allocation3 + $0x38] sm:$0xff]
  %v618 = vld [vmem:[#allocation3 + $0x40] sm:$0xff]
  %v619 = vld [vmem:[#allocation3 + $0x48] sm:$0xff]
  %v620 = vld [vmem:[#allocation3 + $0x50] sm:$0xff]
  %v621 = vld [vmem:[#allocation3 + $0x58] sm:$0xff]
  %v622 = vld [vmem:[#allocation3 + $0x60] sm:$0xff]
  %v623 = vld [vmem:[#allocation3 + $0x68] sm:$0xff]
  %v624 = vld [vmem:[#allocation3 + $0x70] sm:$0xff]
  %v625 = vld [vmem:[#allocation3 + $0x78] sm:$0xff]
  %626 = vadd.xlane.f32.xlu0 %v494
  %v627 = vpop.xlane.xlu0 %626
  %628 = vadd.xlane.f32.xlu0 %v495
  %v629 = vpop.xlane.xlu0 %628
  %630 = vadd.xlane.f32.xlu0 %v496
  %v631 = vpop.xlane.xlu0 %630
  %632 = vadd.xlane.f32.xlu0 %v497
  %v633 = vpop.xlane.xlu0 %632
  %634 = vadd.xlane.f32.xlu0 %v498
  %v635 = vpop.xlane.xlu0 %634
  %636 = vadd.xlane.f32.xlu0 %v499
  %v637 = vpop.xlane.xlu0 %636
  %638 = vadd.xlane.f32.xlu0 %v500
  %v639 = vpop.xlane.xlu0 %638
  %640 = vadd.xlane.f32.xlu0 %v501
  %v641 = vpop.xlane.xlu0 %640
  %642 = vadd.xlane.f32.xlu0 %v502
  %v643 = vpop.xlane.xlu0 %642
  %644 = vadd.xlane.f32.xlu0 %v503
  %v645 = vpop.xlane.xlu0 %644
  %646 = vadd.xlane.f32.xlu0 %v504
  %v647 = vpop.xlane.xlu0 %646
  %648 = vadd.xlane.f32.xlu0 %v505
  %v649 = vpop.xlane.xlu0 %648
  %650 = vadd.xlane.f32.xlu0 %v506
  %v651 = vpop.xlane.xlu0 %650
  %652 = vadd.xlane.f32.xlu0 %v507
  %v653 = vpop.xlane.xlu0 %652
  %654 = vadd.xlane.f32.xlu0 %v508
  %v655 = vpop.xlane.xlu0 %654
  %656 = vadd.xlane.f32.xlu0 %v509
  %v657 = vpop.xlane.xlu0 %656
  %v658 = vadd.f32 %v610, %v627
  %v659 = vadd.f32 %v611, %v629
  %v660 = vadd.f32 %v612, %v631
  %v661 = vadd.f32 %v613, %v633
  %v662 = vadd.f32 %v614, %v635
  %v663 = vadd.f32 %v615, %v637
  %v664 = vadd.f32 %v616, %v639
  %v665 = vadd.f32 %v617, %v641
  %v666 = vadd.f32 %v618, %v643
  %v667 = vadd.f32 %v619, %v645
  %v668 = vadd.f32 %v620, %v647
  %v669 = vadd.f32 %v621, %v649
  %v670 = vadd.f32 %v622, %v651
  %v671 = vadd.f32 %v623, %v653
  %v672 = vadd.f32 %v624, %v655
  %v673 = vadd.f32 %v625, %v657
  %674 = vst.msk [vmem:[#allocation3] sm:$0xff] %vm593, %v658
  %675 = vst.msk [vmem:[#allocation3 + $0x8] sm:$0xff] %vm593, %v659
  %676 = vst.msk [vmem:[#allocation3 + $0x10] sm:$0xff] %vm593, %v660
  %677 = vst.msk [vmem:[#allocation3 + $0x18] sm:$0xff] %vm593, %v661
  %678 = vst.msk [vmem:[#allocation3 + $0x20] sm:$0xff] %vm593, %v662
  %679 = vst.msk [vmem:[#allocation3 + $0x28] sm:$0xff] %vm593, %v663
  %680 = vst.msk [vmem:[#allocation3 + $0x30] sm:$0xff] %vm593, %v664
  %681 = vst.msk [vmem:[#allocation3 + $0x38] sm:$0xff] %vm593, %v665
  %682 = vst.msk [vmem:[#allocation3 + $0x40] sm:$0xff] %vm593, %v666
  %683 = vst.msk [vmem:[#allocation3 + $0x48] sm:$0xff] %vm593, %v667
  %684 = vst.msk [vmem:[#allocation3 + $0x50] sm:$0xff] %vm593, %v668
  %685 = vst.msk [vmem:[#allocation3 + $0x58] sm:$0xff] %vm593, %v669
  %686 = vst.msk [vmem:[#allocation3 + $0x60] sm:$0xff] %vm593, %v670
  %687 = vst.msk [vmem:[#allocation3 + $0x68] sm:$0xff] %vm593, %v671
  %688 = vst.msk [vmem:[#allocation3 + $0x70] sm:$0xff] %vm593, %v672
  %689 = vst.msk [vmem:[#allocation3 + $0x78] sm:$0xff] %vm593, %v673
  // Predicated region
  $region14: #{tpu_custom_call.1} parent=0 // pred_check
    %p690 = pneg %p11
  $region15: #{tpu_custom_call.1} parent=0 // pred_check_branch
    %692 = sbr.rel (%p690) target = $region17
  $region16: #{tpu_custom_call.1} parent=0 // pred_region
    %v693 = vld [vmem:[#allocation2] sm:$0xff]
    %v694 = vld [vmem:[#allocation2 + $0x8] sm:$0xff]
    %v695 = vld [vmem:[#allocation2 + $0x10] sm:$0xff]
    %v696 = vld [vmem:[#allocation2 + $0x18] sm:$0xff]
    %v697 = vld [vmem:[#allocation2 + $0x20] sm:$0xff]
    %v698 = vld [vmem:[#allocation2 + $0x28] sm:$0xff]
    %v699 = vld [vmem:[#allocation2 + $0x30] sm:$0xff]
    %v700 = vld [vmem:[#allocation2 + $0x38] sm:$0xff]
    %v701 = vld [vmem:[#allocation2 + $0x40] sm:$0xff]
    %v702 = vld [vmem:[#allocation2 + $0x48] sm:$0xff]
    %v703 = vld [vmem:[#allocation2 + $0x50] sm:$0xff]
    %v704 = vld [vmem:[#allocation2 + $0x58] sm:$0xff]
    %v705 = vld [vmem:[#allocation2 + $0x60] sm:$0xff]
    %v706 = vld [vmem:[#allocation2 + $0x68] sm:$0xff]
    %v707 = vld [vmem:[#allocation2 + $0x70] sm:$0xff]
    %v708 = vld [vmem:[#allocation2 + $0x78] sm:$0xff]
    %v709 = vld [vmem:[#allocation3] sm:$0xff]
    %v710 = vld [vmem:[#allocation3 + $0x8] sm:$0xff]
    %v711 = vld [vmem:[#allocation3 + $0x10] sm:$0xff]
    %v712 = vld [vmem:[#allocation3 + $0x18] sm:$0xff]
    %v713 = vld [vmem:[#allocation3 + $0x20] sm:$0xff]
    %v714 = vld [vmem:[#allocation3 + $0x28] sm:$0xff]
    %v715 = vld [vmem:[#allocation3 + $0x30] sm:$0xff]
    %v716 = vld [vmem:[#allocation3 + $0x38] sm:$0xff]
    %v717 = vld [vmem:[#allocation3 + $0x40] sm:$0xff]
    %v718 = vld [vmem:[#allocation3 + $0x48] sm:$0xff]
    %v719 = vld [vmem:[#allocation3 + $0x50] sm:$0xff]
    %v720 = vld [vmem:[#allocation3 + $0x58] sm:$0xff]
    %v721 = vld [vmem:[#allocation3 + $0x60] sm:$0xff]
    %v722 = vld [vmem:[#allocation3 + $0x68] sm:$0xff]
    %v723 = vld [vmem:[#allocation3 + $0x70] sm:$0xff]
    %v724 = vld [vmem:[#allocation3 + $0x78] sm:$0xff]
    %vm725 = vcmp.lt.s32.totalorder %v438, 8
    %vm726 = vcmp.lt.s32.totalorder %v439, 8
    %vm727 = vcmp.lt.s32.totalorder %v440, 8
    %vm728 = vcmp.lt.s32.totalorder %v441, 8
    %vm729 = vcmp.lt.s32.totalorder %v442, 8
    %vm730 = vcmp.lt.s32.totalorder %v443, 8
    %vm731 = vcmp.lt.s32.totalorder %v444, 8
    %vm732 = vcmp.lt.s32.totalorder %v445, 8
    %vm733 = vcmp.lt.s32.totalorder %v446, 8
    %vm734 = vcmp.lt.s32.totalorder %v447, 8
    %vm735 = vcmp.lt.s32.totalorder %v448, 8
    %vm736 = vcmp.lt.s32.totalorder %v449, 8
    %vm737 = vcmp.lt.s32.totalorder %v450, 8
    %vm738 = vcmp.lt.s32.totalorder %v451, 8
    %vm739 = vcmp.lt.s32.totalorder %v452, 8
    %vm740 = vcmp.lt.s32.totalorder %v453, 8
    %v741 = vsub.f32 %v709, %v693
    %v742 = vsub.f32 %v710, %v694
    %v743 = vsub.f32 %v711, %v695
    %v744 = vsub.f32 %v712, %v696
    %v745 = vsub.f32 %v713, %v697
    %v746 = vsub.f32 %v714, %v698
    %v747 = vsub.f32 %v715, %v699
    %v748 = vsub.f32 %v716, %v700
    %v749 = vsub.f32 %v717, %v701
    %v750 = vsub.f32 %v718, %v702
    %v751 = vsub.f32 %v719, %v703
    %v752 = vsub.f32 %v720, %v704
    %v753 = vsub.f32 %v721, %v705
    %v754 = vsub.f32 %v722, %v706
    %v755 = vsub.f32 %v723, %v707
    %v756 = vsub.f32 %v724, %v708
    %v757 = vsel %vm725, %v693, %v741
    %v758 = vsel %vm726, %v694, %v742
    %v759 = vsel %vm727, %v695, %v743
    %v760 = vsel %vm728, %v696, %v744
    %v761 = vsel %vm729, %v697, %v745
    %v762 = vsel %vm730, %v698, %v746
    %v763 = vsel %vm731, %v699, %v747
    %v764 = vsel %vm732, %v700, %v748
    %v765 = vsel %vm733, %v701, %v749
    %v766 = vsel %vm734, %v702, %v750
    %v767 = vsel %vm735, %v703, %v751
    %v768 = vsel %vm736, %v704, %v752
    %v769 = vsel %vm737, %v705, %v753
    %v770 = vsel %vm738, %v706, %v754
    %v771 = vsel %vm739, %v707, %v755
    %v772 = vsel %vm740, %v708, %v756
    %v773 = vlog2.pop %v709
    %v774 = vmul.f32 %v773, 0.6931472
    %v775 = vlog2.pop %v710
    %v776 = vmul.f32 %v775, 0.6931472
    %v777 = vlog2.pop %v711
    %v778 = vmul.f32 %v777, 0.6931472
    %v779 = vlog2.pop %v712
    %v780 = vmul.f32 %v779, 0.6931472
    %v781 = vlog2.pop %v713
    %v782 = vmul.f32 %v781, 0.6931472
    %v783 = vlog2.pop %v714
    %v784 = vmul.f32 %v783, 0.6931472
    %v785 = vlog2.pop %v715
    %v786 = vmul.f32 %v785, 0.6931472
    %v787 = vlog2.pop %v716
    %v788 = vmul.f32 %v787, 0.6931472
    %v789 = vlog2.pop %v717
    %v790 = vmul.f32 %v789, 0.6931472
    %v791 = vlog2.pop %v718
    %v792 = vmul.f32 %v791, 0.6931472
    %v793 = vlog2.pop %v719
    %v794 = vmul.f32 %v793, 0.6931472
    %v795 = vlog2.pop %v720
    %v796 = vmul.f32 %v795, 0.6931472
    %v797 = vlog2.pop %v721
    %v798 = vmul.f32 %v797, 0.6931472
    %v799 = vlog2.pop %v722
    %v800 = vmul.f32 %v799, 0.6931472
    %v801 = vlog2.pop %v723
    %v802 = vmul.f32 %v801, 0.6931472
    %v803 = vlog2.pop %v724
    %v804 = vmul.f32 %v803, 0.6931472
    %v805 = vlog2.pop %v757
    %v806 = vmul.f32 %v805, 0.6931472
    %v807 = vlog2.pop %v758
    %v808 = vmul.f32 %v807, 0.6931472
    %v809 = vlog2.pop %v759
    %v810 = vmul.f32 %v809, 0.6931472
    %v811 = vlog2.pop %v760
    %v812 = vmul.f32 %v811, 0.6931472
    %v813 = vlog2.pop %v761
    %v814 = vmul.f32 %v813, 0.6931472
    %v815 = vlog2.pop %v762
    %v816 = vmul.f32 %v815, 0.6931472
    %v817 = vlog2.pop %v763
    %v818 = vmul.f32 %v817, 0.6931472
    %v819 = vlog2.pop %v764
    %v820 = vmul.f32 %v819, 0.6931472
    %v821 = vlog2.pop %v765
    %v822 = vmul.f32 %v821, 0.6931472
    %v823 = vlog2.pop %v766
    %v824 = vmul.f32 %v823, 0.6931472
    %v825 = vlog2.pop %v767
    %v826 = vmul.f32 %v825, 0.6931472
    %v827 = vlog2.pop %v768
    %v828 = vmul.f32 %v827, 0.6931472
    %v829 = vlog2.pop %v769
    %v830 = vmul.f32 %v829, 0.6931472
    %v831 = vlog2.pop %v770
    %v832 = vmul.f32 %v831, 0.6931472
    %v833 = vlog2.pop %v771
    %v834 = vmul.f32 %v833, 0.6931472
    %v835 = vlog2.pop %v772
    %v836 = vmul.f32 %v835, 0.6931472
    %v837 = vsub.f32 %v774, %v806
    %v838 = vsub.f32 %v776, %v808
    %v839 = vsub.f32 %v778, %v810
    %v840 = vsub.f32 %v780, %v812
    %v841 = vsub.f32 %v782, %v814
    %v842 = vsub.f32 %v784, %v816
    %v843 = vsub.f32 %v786, %v818
    %v844 = vsub.f32 %v788, %v820
    %v845 = vsub.f32 %v790, %v822
    %v846 = vsub.f32 %v792, %v824
    %v847 = vsub.f32 %v794, %v826
    %v848 = vsub.f32 %v796, %v828
    %v849 = vsub.f32 %v798, %v830
    %v850 = vsub.f32 %v800, %v832
    %v851 = vsub.f32 %v802, %v834
    %v852 = vsub.f32 %v804, %v836
    %853 = vst.msk [vmem:[%s2] sm:$0xff] %vm593, %v837
    %854 = vst.msk [vmem:[%s2 + $0x8] sm:$0xff] %vm593, %v838
    %855 = vst.msk [vmem:[%s2 + $0x10] sm:$0xff] %vm593, %v839
    %856 = vst.msk [vmem:[%s2 + $0x18] sm:$0xff] %vm593, %v840
    %857 = vst.msk [vmem:[%s2 + $0x20] sm:$0xff] %vm593, %v841
    %858 = vst.msk [vmem:[%s2 + $0x28] sm:$0xff] %vm593, %v842
    %859 = vst.msk [vmem:[%s2 + $0x30] sm:$0xff] %vm593, %v843
    %860 = vst.msk [vmem:[%s2 + $0x38] sm:$0xff] %vm593, %v844
    %861 = vst.msk [vmem:[%s2 + $0x40] sm:$0xff] %vm593, %v845
    %862 = vst.msk [vmem:[%s2 + $0x48] sm:$0xff] %vm593, %v846
    %863 = vst.msk [vmem:[%s2 + $0x50] sm:$0xff] %vm593, %v847
    %864 = vst.msk [vmem:[%s2 + $0x58] sm:$0xff] %vm593, %v848
    %865 = vst.msk [vmem:[%s2 + $0x60] sm:$0xff] %vm593, %v849
    %866 = vst.msk [vmem:[%s2 + $0x68] sm:$0xff] %vm593, %v850
    %867 = vst.msk [vmem:[%s2 + $0x70] sm:$0xff] %vm593, %v851
    %868 = vst.msk [vmem:[%s2 + $0x78] sm:$0xff] %vm593, %v852
  $region17: #{tpu_custom_call.1} parent=0 // pred_fallthru
    _
  // Predicated region
  $region18: #{tpu_custom_call.1} parent=0 // pred_check
    _
  $region19: #{tpu_custom_call.1} parent=0 // pred_check_branch
    %870 = sbr.rel (0) target = $region21
  $region20: #{tpu_custom_call.1} parent=0 // pred_region
    _
  $region21: #{tpu_custom_call.1} parent=0 // pred_fallthru
    _
  // Predicated region
  $region22: #{tpu_custom_call.1} parent=0 // pred_check
    _
  $region23: #{tpu_custom_call.1} parent=0 // pred_check_branch
    %872 = sbr.rel (0) target = $region25
  $region24: #{tpu_custom_call.1} parent=0 // pred_region
    _
  $region25: #{tpu_custom_call.1} parent=0 // pred_fallthru
    _

</llo_original>
